<compile_context>
chip_gen: v6e
topology: v6e:2x2x1
jax: 0.10.0
libtpu: 0.0.40
codegen_flags: <defaults>
</compile_context>

<pallas_src>
import functools

import jax
import jax.numpy as jnp
from jax.experimental import pallas as pl
from jax.experimental.pallas import tpu as pltpu

_EPS = 1e-5
_VMEM_LIMIT = 64 * 1024 * 1024  # explicit scoped-VMEM budget (<= physical on v7x)


def _bn_relu(h, gamma, beta):
    """Training-mode BatchNorm1d (biased var) folded to scale/shift, then ReLU.

    h is f32 (MXU accumulator); all statistics stay in f32 (v5e has no bf16 VPU).
    One-pass E[h^2]-E[h]^2 with a >=0 guard; activations here are O(1) so the
    cancellation caveat from the review does not bite (switch to two-pass if
    activation ranges ever grow).
    """
    inv_b = 1.0 / h.shape[0]
    mean = jnp.sum(h, axis=0, keepdims=True) * inv_b                    # (1, T)
    ex2 = jnp.sum(h * h, axis=0, keepdims=True) * inv_b                 # (1, T)
    var = jnp.maximum(ex2 - mean * mean, 0.0)
    scale = gamma * jax.lax.rsqrt(var + _EPS)                           # (1, T)
    shift = beta - mean * scale                                         # (1, T)
    return jnp.maximum(h * scale + shift, 0.0)                          # (B, T)


# ----------------------------------------------------------------------------
# Kernels
# ----------------------------------------------------------------------------
def residual_y_kernel(x_ref, wt_ref, g_ref, be_ref, y_ref):
    """One O-tile of y = ReLU(BN(x @ Wt)).  x constant across grid steps."""
    xc = x_ref[...].astype(wt_ref.dtype)                                # bf16/f32
    h = jnp.dot(xc, wt_ref[...], preferred_element_type=jnp.float32)    # (B, T)
    y_ref[...] = _bn_relu(h, g_ref[...], be_ref[...]).astype(y_ref.dtype)


def residual_cat_kernel(x_ref, xcols_ref, wt_ref, g_ref, be_ref, out_ref, *, n_y):
    """Grid over (O+I)//T tiles of the concatenated output [y, x].

    Steps j <  n_y : compute one O-tile of y (matmul + folded BN + ReLU).
    Steps j >= n_y : copy one I-tile of the original (exact, f32) x.
    All stores are unmasked lane-dense vst (tile is a multiple of 128).
    """
    j = pl.program_id(0)

    @pl.when(j < n_y)
    def _():
        xc = x_ref[...].astype(wt_ref.dtype)
        h = jnp.dot(xc, wt_ref[...], preferred_element_type=jnp.float32)
        out_ref[...] = _bn_relu(h, g_ref[...], be_ref[...]).astype(out_ref.dtype)

    @pl.when(j >= n_y)
    def _():
        out_ref[...] = xcols_ref[...].astype(out_ref.dtype)


def residual_stack2_kernel(x_ref, wt0_ref, g0_ref, be0_ref,
                           w1y_ref, w1x_ref, g1_ref, be1_ref, out_ref):
    """Fused CTGAN pattern Residual(I,O) -> Residual(I+O,O), one pallas_call.

    The intermediate y0 never leaves VMEM; layer-1's weight is pre-split so no
    in-kernel concat of [y0, x] is needed.  Output is the lane-concatenated
    (B, 2*O) slab [y1, y0].  (jnp.dot(x, w1x) is independent of layer 0; the
    scheduler overlaps it with layer-0's BN/ReLU tail — verified ordering left
    to the LLO scheduler per the review.)
    """
    xc = x_ref[...].astype(wt0_ref.dtype)

    h0 = jnp.dot(xc, wt0_ref[...], preferred_element_type=jnp.float32)   # (B, O)
    y0 = _bn_relu(h0, g0_ref[...], be0_ref[...])

    h1 = jnp.dot(y0.astype(w1y_ref.dtype), w1y_ref[...],
                 preferred_element_type=jnp.float32)
    h1 = h1 + jnp.dot(xc, w1x_ref[...], preferred_element_type=jnp.float32)
    y1 = _bn_relu(h1, g1_ref[...], be1_ref[...])

    out_ref[...] = jnp.concatenate([y1, y0], axis=-1).astype(out_ref.dtype)


# ----------------------------------------------------------------------------
# Parameter prep (done once, outside the hot path)
# ----------------------------------------------------------------------------
def prepare_residual_params(w, b, gamma, beta, compute_dtype=jnp.float32):
    """Pre-transposed (I, O) weight in compute_dtype; (1, O) f32 BN vectors.

    The Linear bias `b` is accepted for API parity but UNUSED: under
    training-mode BatchNorm it cancels exactly against the batch mean.
    """
    del b
    O = w.shape[0]
    wt = jnp.asarray(w, jnp.float32).T.astype(compute_dtype)             # (I, O)
    g = jnp.asarray(gamma, jnp.float32).reshape(1, O)
    be = jnp.asarray(beta, jnp.float32).reshape(1, O)
    return (wt, g, be)


def prepare_residual_stack2_params(w0, b0, g0, be0, w1, b1, g1, be1,
                                   compute_dtype=jnp.float32):
    del b0, b1
    O, _ = w0.shape
    wt0, g0_, be0_ = prepare_residual_params(w0, None, g0, be0, compute_dtype)
    w1t = jnp.asarray(w1, jnp.float32).T                                  # (O+I, O)
    w1y = w1t[:O].astype(compute_dtype)                                   # acts on y0
    w1x = w1t[O:].astype(compute_dtype)                                   # acts on x
    g1_ = jnp.asarray(g1, jnp.float32).reshape(1, O)
    be1_ = jnp.asarray(be1, jnp.float32).reshape(1, O)
    return (wt0, g0_, be0_, w1y, w1x, g1_, be1_)


# ----------------------------------------------------------------------------
# Wrappers
# ----------------------------------------------------------------------------
def _pick_cat_tile(o, i, tile_o):
    for t in sorted({tile_o, 256, 128}, reverse=True):
        if t % 128 == 0 and o % t == 0 and i % t == 0:
            return t
    return None


def _pick_y_tile(o, tile_o):
    for t in sorted({tile_o, 256, 128}, reverse=True):
        if t % 128 == 0 and o % t == 0:
            return t
    return o  # unaligned demo widths: single full-width tile


def residual_forward(x, params, *, tile_o=256):
    """x: (B, I); params from prepare_residual_params. Returns (B, O + I).

    tile_o: output-feature tile (256 good for v6e/v7x, use 128 on v5e).
    """
    wt, gamma, beta = params
    B, I = x.shape
    O = wt.shape[1]
    x32 = x.astype(jnp.float32)
    cparams = pltpu.CompilerParams(dimension_semantics=("parallel",),
                                   vmem_limit_bytes=_VMEM_LIMIT)

    cat_tile = _pick_cat_tile(O, I, tile_o)
    if cat_tile is not None:
        # Lane-aligned path: in-kernel concat, one (B, O+I) output, no XLA concat.
        n_y = O // cat_tile
        n_x = I // cat_tile
        kernel = functools.partial(residual_cat_kernel, n_y=n_y)
        return pl.pallas_call(
            kernel,
            out_shape=jax.ShapeDtypeStruct((B, O + I), jnp.float32),
            grid=(n_y + n_x,),
            in_specs=[
                pl.BlockSpec((B, I), lambda j: (0, 0)),                   # x (const)
                pl.BlockSpec((B, cat_tile),
                             lambda j: (0, jnp.maximum(j - n_y, 0))),     # x cols (copy)
                pl.BlockSpec((I, cat_tile),
                             lambda j: (0, jnp.minimum(j, n_y - 1))),     # W tile
                pl.BlockSpec((1, cat_tile),
                             lambda j: (0, jnp.minimum(j, n_y - 1))),     # gamma
                pl.BlockSpec((1, cat_tile),
                             lambda j: (0, jnp.minimum(j, n_y - 1))),     # beta
            ],
            out_specs=pl.BlockSpec((B, cat_tile), lambda j: (0, j)),
            compiler_params=cparams,
        )(x32, x32, wt, gamma, beta)

    # Fallback (unaligned widths, e.g. the tiny demo): y-only kernel, XLA concat.
    ty = _pick_y_tile(O, tile_o)
    y = pl.pallas_call(
        residual_y_kernel,
        out_shape=jax.ShapeDtypeStruct((B, O), jnp.float32),
        grid=(O // ty,),
        in_specs=[
            pl.BlockSpec((B, I), lambda j: (0, 0)),
            pl.BlockSpec((I, ty), lambda j: (0, j)),
            pl.BlockSpec((1, ty), lambda j: (0, j)),
            pl.BlockSpec((1, ty), lambda j: (0, j)),
        ],
        out_specs=pl.BlockSpec((B, ty), lambda j: (0, j)),
        compiler_params=cparams,
    )(x32, wt, gamma, beta)
    return jnp.concatenate([y, x32], axis=1)


def residual_stack2_forward(x, params):
    """x: (B, I). Returns (B, I + 2*O) = [y1, y0, x] — two stacked Residuals fused."""
    wt0 = params[0]
    B = x.shape[0]
    O = wt0.shape[1]
    x32 = x.astype(jnp.float32)
    # TODO(synk): for many stacked layers / very large B, tile over O with y_k in
    # VMEM scratch instead of the whole-array-resident design used here.
    y = pl.pallas_call(
        residual_stack2_kernel,
        out_shape=jax.ShapeDtypeStruct((B, 2 * O), jnp.float32),
        in_specs=[pl.BlockSpec(memory_space=pltpu.MemorySpace.VMEM)] * 8,
        out_specs=pl.BlockSpec(memory_space=pltpu.MemorySpace.VMEM),
        compiler_params=pltpu.CompilerParams(vmem_limit_bytes=_VMEM_LIMIT),
    )(x32, *params)
    return jnp.concatenate([y, x32], axis=1)


# ----------------------------------------------------------------------------
# Pure-JAX reference (PyTorch semantics: training-mode BN, biased variance)
# ----------------------------------------------------------------------------
def residual_reference(x, w, b, gamma, beta, eps=_EPS):
    h = x @ w.T + b
    mean = jnp.mean(h, axis=0, keepdims=True)
    var = jnp.mean((h - mean) ** 2, axis=0, keepdims=True)
    y = (h - mean) / jnp.sqrt(var + eps) * gamma + beta
    y = jnp.maximum(y, 0.0)
    return jnp.concatenate([y, x], axis=1)


def _make_layer(key, i, o):
    kw, kb, kg, kbe = jax.random.split(key, 4)
    bound = 1.0 / jnp.sqrt(jnp.float32(i))
    w = jax.random.uniform(kw, (o, i), jnp.float32, -bound, bound)
    b = jax.random.uniform(kb, (o,), jnp.float32, -bound, bound)   # nonzero: proves it cancels
    g = jax.random.uniform(kg, (o,), jnp.float32, 0.5, 1.5)
    be = 0.1 * jax.random.normal(kbe, (o,), jnp.float32)
    return w, b, g, be


if __name__ == "__main__":
    key = jax.random.PRNGKey(0)
    k1, k2, k3, k4, k5 = jax.random.split(key, 5)

    # --- 1. Tiny unaligned widths (fallback path), f32 ------------------------
    B, I, O = 8, 32, 64                     # Residual(i=32, o=64)
    x = jax.random.normal(k1, (B, I), dtype=jnp.float32)
    w0, b0, g0, be0 = _make_layer(k2, I, O)
    params = prepare_residual_params(w0, b0, g0, be0)
    out = jax.block_until_ready(residual_forward(x, params))
    ref = residual_reference(x, w0, b0, g0, be0)
    assert out.shape == (B, O + I), out.shape
    assert jnp.allclose(out, ref, atol=1e-4, rtol=1e-4), "tiny f32 mismatch"

    # --- 2. Lane-aligned widths: tiled grid + in-kernel concat, f32 -----------
    B2, I2, O2 = 16, 128, 256
    x2 = jax.random.normal(k3, (B2, I2), dtype=jnp.float32)
    w2, b2, g2, be2 = _make_layer(k4, I2, O2)
    params2 = prepare_residual_params(w2, b2, g2, be2)
    out2 = jax.block_until_ready(residual_forward(x2, params2))
    ref2 = residual_reference(x2, w2, b2, g2, be2)
    assert out2.shape == (B2, O2 + I2), out2.shape
    assert jnp.allclose(out2, ref2, atol=1e-4, rtol=1e-4), "aligned f32 mismatch"

    # --- 3. Same shapes with bf16 MXU operands (BN math stays f32) ------------
    params2_bf16 = prepare_residual_params(w2, b2, g2, be2,
                                           compute_dtype=jnp.bfloat16)
    out2_bf16 = jax.block_until_ready(residual_forward(x2, params2_bf16))
    assert jnp.allclose(out2_bf16, ref2, atol=5e-2, rtol=5e-2), "bf16 mismatch"
    # Pass-through x columns must stay exact even with bf16 dot operands.
    assert jnp.array_equal(out2_bf16[:, O2:], x2), "bf16 passthrough not exact"

    # --- 4. Fused 2-layer Residual stack (CTGAN pattern), one pallas_call -----
    w1, b1, g1, be1 = _make_layer(k5, I + O, O)
    stack_params = prepare_residual_stack2_params(w0, b0, g0, be0,
                                                  w1, b1, g1, be1)
    outs = jax.block_until_ready(residual_stack2_forward(x, stack_params))
    refs = residual_reference(ref, w1, b1, g1, be1)   # stacked reference
    assert outs.shape == (B, I + 2 * O), outs.shape
    assert jnp.allclose(outs, refs, atol=1e-4, rtol=1e-4), "fused-stack mismatch"

    # TODO(synk): BatchNorm1d running_mean/running_var buffer updates (training-mode
    # side effect, momentum=0.1) are not reproduced; only the forward output is.
    print("KERNEL_OK")
</pallas_src>

<mosaic_0001>
module attributes {stable_mosaic.version = 11 : i64} {
  func.func @residual_y_kernel(%arg0: i32, %arg1: memref<8x32xf32, #tpu.memory_space<vmem>>, %arg2: memref<32x64xf32, #tpu.memory_space<vmem>>, %arg3: memref<1x64xf32, #tpu.memory_space<vmem>>, %arg4: memref<1x64xf32, #tpu.memory_space<vmem>>, %arg5: memref<8x64xf32, #tpu.memory_space<vmem>>) attributes {dimension_semantics = [#tpu.dimension_semantics<parallel>], iteration_bounds = array<i64: 1>, scalar_prefetch = 0 : i64, scratch_operands = 0 : i64, tpu.core_type = #tpu.core_type<tc>, window_params = [{pipeline_mode = #tpu.pipeline_mode<synchronous>, transform_indices = @transform_0, window_bounds = array<i64: 8, 32>}, {transform_indices = @transform_1, window_bounds = array<i64: 32, 64>}, {transform_indices = @transform_2, window_bounds = array<i64: 1, 64>}, {transform_indices = @transform_3, window_bounds = array<i64: 1, 64>}, {transform_indices = @transform_4, window_bounds = array<i64: 8, 64>}]} {
    %c0 = arith.constant 0 : index
    %c0_0 = arith.constant 0 : index
    %0 = vector.load %arg1[%c0, %c0_0] : memref<8x32xf32, #tpu.memory_space<vmem>>, vector<8x32xf32>
    %c0_1 = arith.constant 0 : index
    %c0_2 = arith.constant 0 : index
    %1 = vector.load %arg2[%c0_1, %c0_2] : memref<32x64xf32, #tpu.memory_space<vmem>>, vector<32x64xf32>
    %cst = arith.constant dense<0.000000e+00> : vector<8x64xf32>
    %2 = tpu.matmul %0, %1, %cst {dimension_numbers = #tpu.dot_dimension_numbers<[1], [0], [0], [1], [0, 0, 1, 1], [], []>} : vector<8x32xf32>, vector<32x64xf32>, vector<8x64xf32> -> vector<8x64xf32>
    %c0_3 = arith.constant 0 : index
    %c0_4 = arith.constant 0 : index
    %3 = vector.load %arg3[%c0_3, %c0_4] : memref<1x64xf32, #tpu.memory_space<vmem>>, vector<1x64xf32>
    %c0_5 = arith.constant 0 : index
    %c0_6 = arith.constant 0 : index
    %4 = vector.load %arg4[%c0_5, %c0_6] : memref<1x64xf32, #tpu.memory_space<vmem>>, vector<1x64xf32>
    %cst_7 = arith.constant dense<0.000000e+00> : vector<64xf32>
    %5 = vector.multi_reduction <add>, %2, %cst_7 [0] : vector<8x64xf32> to vector<64xf32>
    %6 = vector.shape_cast %5 : vector<64xf32> to vector<1x64xf32>
    %cst_8 = arith.constant 1.250000e-01 : f32
    %7 = vector.broadcast %cst_8 : f32 to vector<1x64xf32>
    %8 = arith.mulf %6, %7 : vector<1x64xf32>
    %9 = arith.mulf %2, %2 : vector<8x64xf32>
    %cst_9 = arith.constant dense<0.000000e+00> : vector<64xf32>
    %10 = vector.multi_reduction <add>, %9, %cst_9 [0] : vector<8x64xf32> to vector<64xf32>
    %11 = vector.shape_cast %10 : vector<64xf32> to vector<1x64xf32>
    %cst_10 = arith.constant 1.250000e-01 : f32
    %12 = vector.broadcast %cst_10 : f32 to vector<1x64xf32>
    %13 = arith.mulf %11, %12 : vector<1x64xf32>
    %14 = arith.mulf %8, %8 : vector<1x64xf32>
    %15 = arith.subf %13, %14 : vector<1x64xf32>
    %cst_11 = arith.constant 0.000000e+00 : f32
    %16 = vector.broadcast %cst_11 : f32 to vector<1x64xf32>
    %17 = arith.maximumf %15, %16 : vector<1x64xf32>
    %cst_12 = arith.constant 9.99999974E-6 : f32
    %18 = vector.broadcast %cst_12 : f32 to vector<1x64xf32>
    %19 = arith.addf %17, %18 : vector<1x64xf32>
    %20 = math.rsqrt %19 : vector<1x64xf32>
    %21 = arith.mulf %3, %20 : vector<1x64xf32>
    %22 = arith.mulf %8, %21 : vector<1x64xf32>
    %23 = arith.subf %4, %22 : vector<1x64xf32>
    %24 = vector.broadcast %21 : vector<1x64xf32> to vector<8x64xf32>
    %25 = arith.mulf %2, %24 : vector<8x64xf32>
    %26 = vector.broadcast %23 : vector<1x64xf32> to vector<8x64xf32>
    %27 = arith.addf %25, %26 : vector<8x64xf32>
    %cst_13 = arith.constant 0.000000e+00 : f32
    %28 = vector.broadcast %cst_13 : f32 to vector<8x64xf32>
    %29 = arith.maximumf %27, %28 : vector<8x64xf32>
    %c0_14 = arith.constant 0 : index
    %c0_15 = arith.constant 0 : index
    %30 = vector.load %arg5[%c0_14, %c0_15] : memref<8x64xf32, #tpu.memory_space<vmem>>, vector<8x64xf32>
    tpu.vector_store %arg5[%c0_14, %c0_15], %29 {strides = array<i32>} : memref<8x64xf32, #tpu.memory_space<vmem>>, vector<8x64xf32>,
    return
  }
  func.func @transform_0(%arg0: i32) -> (i32, i32) {
    %c0_i32 = arith.constant 0 : i32
    %c0_i32_0 = arith.constant 0 : i32
    %c0_i32_1 = arith.constant 0 : i32
    return %c0_i32, %c0_i32_0 : i32, i32
  }
  func.func @transform_1(%arg0: i32) -> (i32, i32) {
    %c0_i32 = arith.constant 0 : i32
    %c0_i32_0 = arith.constant 0 : i32
    return %c0_i32, %arg0 : i32, i32
  }
  func.func @transform_2(%arg0: i32) -> (i32, i32) {
    %c0_i32 = arith.constant 0 : i32
    %c0_i32_0 = arith.constant 0 : i32
    return %c0_i32, %arg0 : i32, i32
  }
  func.func @transform_3(%arg0: i32) -> (i32, i32) {
    %c0_i32 = arith.constant 0 : i32
    %c0_i32_0 = arith.constant 0 : i32
    return %c0_i32, %arg0 : i32, i32
  }
  func.func @transform_4(%arg0: i32) -> (i32, i32) {
    %c0_i32 = arith.constant 0 : i32
    %c0_i32_0 = arith.constant 0 : i32
    return %c0_i32, %arg0 : i32, i32
  }
}

</mosaic_0001>

<llo_original>
// kernel: tpu_custom_call.1
$region0: #{tpu_custom_call.1}
  #allocation0 [shape = 'u32[]', space=smem, size = 0x4, offset = 0x4, fixed_abs, tag = 'smem constant byte address 0x4 - core index']
  #allocation1 [shape = 'u32[144,128]{1,0:T(1,128)}', space=vmem, size = 0x12000, scoped, tag = 'internal scratch']
  %s0 = inlined_call_operand.hbm [shape: f32[8,32], index: 0, kind: input, shape index: {}]
  %s1 = inlined_call_operand.hbm [shape: f32[32,64], index: 1, kind: input, shape index: {}]
  %s2 = inlined_call_operand.vmem [shape: f32[1,64], index: 2, kind: input, shape index: {}]
  %s3 = inlined_call_operand.vmem [shape: f32[1,64], index: 3, kind: input, shape index: {}]
  %s4 = inlined_call_operand.hbm [shape: f32[8,64], index: 4, kind: output, shape index: {}]
  %s5 = sld [smem:[#allocation0]]
  $region34: #{tpu_custom_call.1} parent=0
    _
  %s7 = ssub.s32 1, %s5
  %s8 = scalar_select 0, %s7, %s5
  $region1: #{tpu_custom_call.1} parent=0
    #allocation2 [shape = 'u8[4096]{0}', space=vmem, size = 0x1000, scoped, tag = 'input window, operand 0, single buffered']
    #allocation3 [shape = 's32[1]{0}', space=sflag, size = 0x4, scoped, tag = 'scoped memory for tpu_custom_call.1']
    #allocation4 [shape = 's32[1]{0}', space=sflag, size = 0x4, scoped, tag = 'scoped memory for tpu_custom_call.1']
    #allocation5 [shape = 'u8[16384]{0}', space=vmem, size = 0x4000, scoped, tag = 'input window, operand 1, single buffered']
    #allocation6 [shape = 's32[1]{0}', space=sflag, size = 0x4, scoped, tag = 'scoped memory for tpu_custom_call.1']
    #allocation7 [shape = 'u8[4096]{0}', space=vmem, size = 0x1000, scoped, tag = 'output window, operand 0, single buffered']
    %9 = vsyncpa [#allocation3], 0
    %10 = vsyncpa [#allocation6], 0
    %11 = vsyncpa [#allocation4], 0
    // Predicated region
    $region2: #{tpu_custom_call.1} parent=1 // pred_check
      _
    $region3: #{tpu_custom_call.1} parent=1 // pred_check_branch
      %13 = sbr.rel (0) target = $region5
    $region4: #{tpu_custom_call.1} parent=1 // pred_region
      %s15 = ssub.s32 128, 128
      %16 = vsyncadd [#allocation3], %s15
      %s18 = sshll.u32 [#allocation2], 4
      %s19 = int_to_ptr.vmem [resolvable:$true] %s18
      %21 = dma.hbm_to_vmem [thread:$0]  %s0, 128, %s19, [#allocation3]
    $region5: #{tpu_custom_call.1} parent=1 // pred_fallthru
      _
    // Predicated region
    $region6: #{tpu_custom_call.1} parent=1 // pred_check
      _
    $region7: #{tpu_custom_call.1} parent=1 // pred_check_branch
      %23 = sbr.rel (0) target = $region9
    $region8: #{tpu_custom_call.1} parent=1 // pred_region
      %s25 = ssub.s32 512, 512
      %26 = vsyncadd [#allocation6], %s25
      %s27 = sshll.u32 [#allocation5], 4
      %s28 = int_to_ptr.vmem [resolvable:$true] %s27
      %33 = dma.hbm_to_vmem [thread:$0]  %s1, 512, %s28, [#allocation6], 128, 128, 8
    $region9: #{tpu_custom_call.1} parent=1 // pred_fallthru
      _
    // Predicated region
    $region10: #{tpu_custom_call.1} parent=1 // pred_check
      _
    $region11: #{tpu_custom_call.1} parent=1 // pred_check_branch
      %35 = sbr.rel (0) target = $region13
    $region12: #{tpu_custom_call.1} parent=1 // pred_region
      _
    $region13: #{tpu_custom_call.1} parent=1 // pred_fallthru
      _
    // Predicated region
    $region14: #{tpu_custom_call.1} parent=1 // pred_check
      _
    $region15: #{tpu_custom_call.1} parent=1 // pred_check_branch
      %37 = sbr.rel (0) target = $region17
    $region16: #{tpu_custom_call.1} parent=1 // pred_region
      _
    $region17: #{tpu_custom_call.1} parent=1 // pred_fallthru
      _
    // Predicated region
    $region18: #{tpu_custom_call.1} parent=1 // pred_check
      _
    $region19: #{tpu_custom_call.1} parent=1 // pred_check_branch
      %39 = sbr.rel (0) target = $region21
    $region20: #{tpu_custom_call.1} parent=1 // pred_region
      %40 = dma.done [#allocation3], 128
    $region21: #{tpu_custom_call.1} parent=1 // pred_fallthru
      _
    // Predicated region
    $region22: #{tpu_custom_call.1} parent=1 // pred_check
      _
    $region23: #{tpu_custom_call.1} parent=1 // pred_check_branch
      %42 = sbr.rel (0) target = $region25
    $region24: #{tpu_custom_call.1} parent=1 // pred_region
      %43 = dma.done [#allocation6], 512
    $region25: #{tpu_custom_call.1} parent=1 // pred_fallthru
      _
    %v44 = vld [vmem:[#allocation2] sm:$0xff]
    %v45 = vld [vmem:[#allocation5] sm:$0xff]
    %v46 = vld [vmem:[#allocation5 + $0x8] sm:$0xff]
    %v47 = vld [vmem:[#allocation5 + $0x10] sm:$0xff]
    %v48 = vld [vmem:[#allocation5 + $0x18] sm:$0xff]
    %vm49 = vcmask 261120
    %v51 = vsel %vm49, %v44, 0
    %53 = vmatprep.subr.mxu0 0.0
    %54 = vmatpush1.msra.mxu0 0.0
    %55 = vmatprep.subr.mxu0 0.0
    %56 = vmatpush1.msra.mxu0 0.0
    %57 = vmatprep.subr.mxu0 0.0
    %58 = vmatpush1.msra.mxu0 0.0
    %59 = vmatprep.subr.mxu0 0.0
    %60 = vmatpush1.msra.mxu0 0.0
    %61 = vmatprep.subr.mxu0 0.0
    %62 = vmatpush1.msra.mxu0 0.0
    %63 = vmatprep.subr.mxu0 0.0
    %64 = vmatpush1.msra.mxu0 0.0
    %65 = vmatprep.subr.mxu0 0.0
    %66 = vmatpush1.msra.mxu0 0.0
    %67 = vmatprep.subr.mxu0 0.0
    %68 = vmatpush1.msra.mxu0 0.0
    %69 = vmatprep.subr.mxu0 0.0
    %70 = vmatpush1.msra.mxu0 0.0
    %71 = vmatprep.subr.mxu0 0.0
    %72 = vmatpush1.msra.mxu0 0.0
    %73 = vmatprep.subr.mxu0 0.0
    %74 = vmatpush1.msra.mxu0 0.0
    %75 = vmatprep.subr.mxu0 0.0
    %76 = vmatpush1.msra.mxu0 0.0
    %77 = vmatprep.subr.mxu0 0.0
    %78 = vmatpush1.msra.mxu0 %v48
    %79 = vmatprep.subr.mxu0 0.0
    %80 = vmatpush1.msra.mxu0 %v47
    %81 = vmatprep.subr.mxu0 0.0
    %82 = vmatpush1.msra.mxu0 %v46
    %83 = vmatprep.subr.mxu0 0.0
    %84 = vmatpush1.msra.mxu0 %v45
    %85 = vmatprep.subr.mxu0 0.0
    %86 = vmatpush2.msra.mxu0 0.0
    %87 = vmatprep.subr.mxu0 0.0
    %88 = vmatpush2.msra.mxu0 0.0
    %89 = vmatprep.subr.mxu0 0.0
    %90 = vmatpush2.msra.mxu0 0.0
    %91 = vmatprep.subr.mxu0 0.0
    %92 = vmatpush2.msra.mxu0 0.0
    %93 = vmatprep.subr.mxu0 0.0
    %94 = vmatpush2.msra.mxu0 0.0
    %95 = vmatprep.subr.mxu0 0.0
    %96 = vmatpush2.msra.mxu0 0.0
    %97 = vmatprep.subr.mxu0 0.0
    %98 = vmatpush2.msra.mxu0 0.0
    %99 = vmatprep.subr.mxu0 0.0
    %100 = vmatpush2.msra.mxu0 0.0
    %101 = vmatprep.subr.mxu0 0.0
    %102 = vmatpush2.msra.mxu0 0.0
    %103 = vmatprep.subr.mxu0 0.0
    %104 = vmatpush2.msra.mxu0 0.0
    %105 = vmatprep.subr.mxu0 0.0
    %106 = vmatpush2.msra.mxu0 0.0
    %107 = vmatprep.subr.mxu0 0.0
    %108 = vmatpush2.msra.mxu0 0.0
    %109 = vmatprep.subr.mxu0 0.0
    %110 = vmatpush2.msra.mxu0 0.0
    %111 = vmatprep.subr.mxu0 0.0
    %112 = vmatpush2.msra.mxu0 0.0
    %113 = vmatprep.subr.mxu0 0.0
    %114 = vmatpush2.msra.mxu0 0.0
    %115 = vmatprep.subr.mxu0 0.0
    %116 = vmatpush2.msra.mxu0 0.0
    %117 = vmatprep.mubr.f32.mxu0 0.0
    %118 = vmatmul.mubr.f32.gmra.mxu0 %v51
    %v119 = vpop.f32.mrf.mxu0
    %v120 = vadd.f32 0.0, %v119
    %v121 = vpop.f32.mrf.mxu0
    %122 = vdwg.mxu0
    %v123 = vld [vmem:[%s2] sm:$0x1]
    %v124 = vld [vmem:[%s3] sm:$0x1]
    %vm125 = vcmask 523264
    %v126 = vsel %vm125, %v120, 0.0
    %v127 = vrot.slane %v126, 4
    %v128 = vadd.f32 %v126, %v127
    %v129 = vrot.slane %v128, 2
    %v130 = vadd.f32 %v128, %v129
    %v131 = vrot.slane %v130, 1
    %v132 = vadd.f32 %v130, %v131
    %v133 = vmul.f32 %v132, 0.125
    %v134 = vmul.f32 %v120, %v120
    %v135 = vsel %vm125, %v134, 0.0
    %v136 = vrot.slane %v135, 4
    %v137 = vadd.f32 %v135, %v136
    %v138 = vrot.slane %v137, 2
    %v139 = vadd.f32 %v137, %v138
    %v140 = vrot.slane %v139, 1
    %v141 = vadd.f32 %v139, %v140
    %v142 = vmul.f32 %v141, 0.125
    %v143 = vmul.f32 %v133, %v133
    %v144 = vsub.f32 %v142, %v143
    %v145 = vmax.f32 %v144, 0.0
    %v146 = vadd.f32 %v145, 1e-05
    %v147 = vrsqrt.pop %v146
    %v148 = vmul.f32 %v123, %v147
    %v149 = vmul.f32 %v133, %v148
    %v150 = vsub.f32 %v124, %v149
    %v152 = vlaneseq
    %v153 = vshrl.u32 %v152, 7
    %v154 = vsub.s32 0, %v153
    %v155 = vrot.slane %v148, %v154
    %v157 = vmul.f32 %v120, %v155
    %v159 = vlaneseq
    %v160 = vshrl.u32 %v159, 7
    %v161 = vsub.s32 0, %v160
    %v162 = vrot.slane %v150, %v161
    %v164 = vadd.f32 %v157, %v162
    %v165 = vmax.f32 %v164, 0.0
    %166 = vst.msk [vmem:[#allocation7] sm:$0xff] %vm125, %v165
    // Predicated region
    $region26: #{tpu_custom_call.1} parent=1 // pred_check
      _
    $region27: #{tpu_custom_call.1} parent=1 // pred_check_branch
      %168 = sbr.rel (0) target = $region29
    $region28: #{tpu_custom_call.1} parent=1 // pred_region
      %s170 = ssub.s32 128, 128
      %171 = vsyncadd [#allocation4], %s170
      %s173 = sshll.u32 [#allocation7], 4
      %s174 = int_to_ptr.vmem [resolvable:$true] %s173
      %176 = dma.vmem_to_hbm [thread:$0]  %s174, 128, %s4, [#allocation4]
    $region29: #{tpu_custom_call.1} parent=1 // pred_fallthru
      _
    // Predicated region
    $region30: #{tpu_custom_call.1} parent=1 // pred_check
      _
    $region31: #{tpu_custom_call.1} parent=1 // pred_check_branch
      %178 = sbr.rel (0) target = $region33
    $region32: #{tpu_custom_call.1} parent=1 // pred_region
      %179 = dma.done [#allocation4], 128
    $region33: #{tpu_custom_call.1} parent=1 // pred_fallthru
      _
    %180 = vsyncpa [#allocation3], 1
    %181 = vsyncpa [#allocation6], 1
    %182 = vsyncpa [#allocation4], 1

</llo_original>
